<compile_context>
chip_gen: v6e
topology: v6e:2x2x1
jax: 0.10.0
libtpu: 0.0.40
codegen_flags: <defaults>
</compile_context>

<pallas_src>
import functools

import jax
import jax.numpy as jnp
from jax.experimental import pallas as pl
from jax.experimental.pallas import tpu as pltpu

EPS = 1e-5

# Minimum sublane multiple per element byte-width (f32 / bf16 / int8-fp8).
_SUBLANE = {4: 8, 2: 16, 1: 32}

# Tile-sized fp32 temporaries the kernel materializes after fusion:
# x.astype(f32), the centered/normalized product, y before the output cast.
_F32_TEMPS = 3

# Keep tiles sane even at tiny hidden sizes (per-step I/O is already >> the
# ~0.35 us fixed grid-step overhead well below this).
_MAX_BLOCK_ROWS = 8192


@functools.lru_cache(maxsize=1)
def _vmem_capacity_bytes():
    """Physical VMEM per TensorCore; conservative fallback if the query fails."""
    try:
        return int(pltpu.get_tpu_info().vmem_capacity_bytes)
    except Exception:
        return 64 << 20  # v7x per-TC size; safe lower bound on every generation


def _round_up(x, m):
    return ((x + m - 1) // m) * m


def _choose_block_rows(rows, ndim, x_bytes, out_bytes):
    """Pick a dtype-aligned row tile whose full VMEM footprint (double-buffered
    in+out tiles plus fp32 compute intermediates) stays inside a generation-
    aware budget."""
    sub = _SUBLANE.get(x_bytes, 8)
    rows_rounded = _round_up(rows, sub)

    # Per-row VMEM charge: 2x(in+out) for double buffering + fp32 temporaries.
    per_row = 2 * (x_bytes + out_bytes) * ndim + _F32_TEMPS * 4 * ndim

    # ~70% of physical VMEM for the tiles; the rest is headroom for Mosaic
    # internal scratch, params and DMA descriptors (also keeps us safely under
    # the 0.875x clamp applied to vmem_limit_bytes below).
    budget = int(0.70 * _vmem_capacity_bytes())

    br = max(budget // per_row, 1)
    br = max((br // sub) * sub, sub)        # sublane-packing multiple
    br = min(br, _MAX_BLOCK_ROWS, rows_rounded)

    # Prefer an even grid so dimension_semantics=("parallel",) splits cleanly
    # across v7x's two TensorCores (perf heuristic only; rows are independent
    # so correctness never depends on the step count).
    steps = -(-rows_rounded // br)
    if steps > 1 and steps % 2 == 1:
        br = max(_round_up(-(-rows_rounded // (steps + 1)), sub), sub)
    return br


def _layernorm_kernel_bias(x_ref, w_ref, b_ref, o_ref, *, inv_n):
    x = x_ref[...].astype(jnp.float32)
    # Single-pass statistics: both XLU reductions issue off the same tile read.
    s = jnp.sum(x, axis=-1, keepdims=True)
    sq = jnp.sum(x * x, axis=-1, keepdims=True)
    mean = s * inv_n
    var = sq * inv_n - mean * mean                 # biased variance (PyTorch)
    inv = jax.lax.rsqrt(var + EPS)                 # EUP
    y = (x - mean) * inv * w_ref[...].astype(jnp.float32) + b_ref[...].astype(jnp.float32)
    o_ref[...] = y.astype(o_ref.dtype)


def _layernorm_kernel_nobias(x_ref, w_ref, o_ref, *, inv_n):
    x = x_ref[...].astype(jnp.float32)
    s = jnp.sum(x, axis=-1, keepdims=True)
    sq = jnp.sum(x * x, axis=-1, keepdims=True)
    mean = s * inv_n
    var = sq * inv_n - mean * mean
    inv = jax.lax.rsqrt(var + EPS)
    y = (x - mean) * inv * w_ref[...].astype(jnp.float32)
    o_ref[...] = y.astype(o_ref.dtype)


@jax.jit
def layer_norm(x, weight, bias=None):
    """Equivalent of F.layer_norm(x, (ndim,), weight, bias, eps=1e-5).

    x: (..., ndim). weight: (ndim,). bias: (ndim,) or None.
    """
    orig_shape = x.shape
    ndim = orig_shape[-1]
    rows = 1
    for d in orig_shape[:-1]:
        rows *= d
    x2 = x.reshape(rows, ndim)

    x_bytes = jnp.dtype(x.dtype).itemsize
    out_bytes = x_bytes                              # output kept in input dtype
    block_rows = _choose_block_rows(rows, ndim, x_bytes, out_bytes)
    grid = (pl.cdiv(rows, block_rows),)              # partial last block is clipped

    # TODO(synk): if ndim is not a multiple of 128, lane occupancy is ndim/128
    # and output stores become masked vst.msk; production hidden sizes should
    # be 128-multiples (no packed layout path for tiny feature dims here).
    # TODO(synk): extremely large ndim (feature dim alone near VMEM capacity)
    # would need a two-pass / feature-tiled reduction; not handled here.

    w2 = weight.reshape(1, ndim)
    x_spec = pl.BlockSpec((block_rows, ndim), lambda i: (i, 0))
    p_spec = pl.BlockSpec((1, ndim), lambda i: (0, 0))
    o_spec = pl.BlockSpec((block_rows, ndim), lambda i: (i, 0))
    out_shape = jax.ShapeDtypeStruct((rows, ndim), x.dtype)

    # Scoped-VMEM limit: charge the double-buffered I/O tiles AND the fp32
    # intermediates; clamp to ~0.875x of physical VMEM so Mosaic keeps
    # headroom for its internal scratch (never hand it the full 64 MiB on v7x).
    capacity = _vmem_capacity_bytes()
    cap_limit = int(0.875 * capacity)
    tile_bytes = block_rows * ndim * (2 * (x_bytes + out_bytes) + _F32_TEMPS * 4)
    param_bytes = 4 * ndim * 4                       # weight + bias, buffered
    vmem_limit = min(tile_bytes + param_bytes + (2 << 20), cap_limit)
    vmem_limit = max(vmem_limit, min(32 << 20, cap_limit))

    cparams = pltpu.CompilerParams(
        dimension_semantics=("parallel",),           # shards rows over v7x's 2 TCs
        vmem_limit_bytes=int(vmem_limit),
    )

    inv_n = 1.0 / float(ndim)

    if bias is not None:
        b2 = bias.reshape(1, ndim)
        y2 = pl.pallas_call(
            functools.partial(_layernorm_kernel_bias, inv_n=inv_n),
            out_shape=out_shape,
            grid=grid,
            in_specs=[x_spec, p_spec, p_spec],
            out_specs=o_spec,
            compiler_params=cparams,
        )(x2, w2, b2)
    else:
        y2 = pl.pallas_call(
            functools.partial(_layernorm_kernel_nobias, inv_n=inv_n),
            out_shape=out_shape,
            grid=grid,
            in_specs=[x_spec, p_spec],
            out_specs=o_spec,
            compiler_params=cparams,
        )(x2, w2)

    return y2.reshape(orig_shape)


def _ref_layer_norm(x, weight, bias):
    xf = x.astype(jnp.float32)
    mean = jnp.mean(xf, axis=-1, keepdims=True)
    var = jnp.mean((xf - mean) ** 2, axis=-1, keepdims=True)
    y = (xf - mean) / jnp.sqrt(var + EPS) * weight.astype(jnp.float32)
    if bias is not None:
        y = y + bias.astype(jnp.float32)
    return y


if __name__ == "__main__":
    key = jax.random.PRNGKey(0)
    batch, seq, hidden = 2, 8, 32

    x = jax.random.normal(key, (batch, seq, hidden), dtype=jnp.float32)

    # Deterministic parameter init matching nn.Parameter(torch.ones/zeros(ndim)).
    weight = jnp.ones((hidden,), dtype=jnp.float32)
    bias = jnp.zeros((hidden,), dtype=jnp.float32)

    # bias=True path
    y = layer_norm(x, weight, bias)
    jax.block_until_ready(y)
    ref = _ref_layer_norm(x, weight, bias)
    assert jnp.max(jnp.abs(y.astype(jnp.float32) - ref)) < 5e-5

    # bias=False path
    y_nb = layer_norm(x, weight, None)
    jax.block_until_ready(y_nb)
    ref_nb = _ref_layer_norm(x, weight, None)
    assert jnp.max(jnp.abs(y_nb.astype(jnp.float32) - ref_nb)) < 5e-5

    # Rows not divisible by the row tile -> exercises the clipped partial block.
    key2 = jax.random.fold_in(key, 1)
    x_odd = jax.random.normal(key2, (3, 5, hidden), dtype=jnp.float32)
    y_odd = layer_norm(x_odd, weight, bias)
    jax.block_until_ready(y_odd)
    assert jnp.max(jnp.abs(y_odd - _ref_layer_norm(x_odd, weight, bias))) < 5e-5

    # bf16 I/O path (sublane multiple 16, narrow dtype kept end-to-end).
    x_bf = x.astype(jnp.bfloat16)
    y_bf = layer_norm(x_bf, weight.astype(jnp.bfloat16), bias.astype(jnp.bfloat16))
    jax.block_until_ready(y_bf)
    assert jnp.max(jnp.abs(y_bf.astype(jnp.float32) - ref)) < 3e-2

    print("KERNEL_OK")
</pallas_src>

<mosaic_0001>
module attributes {stable_mosaic.version = 11 : i64} {
  func.func @_layernorm_kernel_bias(%arg0: i32, %arg1: memref<16x32xf32, #tpu.memory_space<vmem>>, %arg2: memref<1x32xf32, #tpu.memory_space<vmem>>, %arg3: memref<1x32xf32, #tpu.memory_space<vmem>>, %arg4: memref<16x32xf32, #tpu.memory_space<vmem>>) attributes {dimension_semantics = [#tpu.dimension_semantics<parallel>], iteration_bounds = array<i64: 1>, scalar_prefetch = 0 : i64, scratch_operands = 0 : i64, tpu.core_type = #tpu.core_type<tc>, window_params = [{transform_indices = @transform_0, window_bounds = array<i64: 16, 32>}, {pipeline_mode = #tpu.pipeline_mode<synchronous>, transform_indices = @transform_1, window_bounds = array<i64: 1, 32>}, {pipeline_mode = #tpu.pipeline_mode<synchronous>, transform_indices = @transform_2, window_bounds = array<i64: 1, 32>}, {transform_indices = @transform_3, window_bounds = array<i64: 16, 32>}]} {
    %c0 = arith.constant 0 : index
    %c0_0 = arith.constant 0 : index
    %0 = vector.load %arg1[%c0, %c0_0] : memref<16x32xf32, #tpu.memory_space<vmem>>, vector<16x32xf32>
    %cst = arith.constant dense<0.000000e+00> : vector<16xf32>
    %1 = vector.multi_reduction <add>, %0, %cst [1] : vector<16x32xf32> to vector<16xf32>
    %2 = vector.shape_cast %1 : vector<16xf32> to vector<16x1xf32>
    %3 = arith.mulf %0, %0 : vector<16x32xf32>
    %cst_1 = arith.constant dense<0.000000e+00> : vector<16xf32>
    %4 = vector.multi_reduction <add>, %3, %cst_1 [1] : vector<16x32xf32> to vector<16xf32>
    %5 = vector.shape_cast %4 : vector<16xf32> to vector<16x1xf32>
    %cst_2 = arith.constant 3.125000e-02 : f32
    %6 = vector.broadcast %cst_2 : f32 to vector<16x1xf32>
    %7 = arith.mulf %2, %6 : vector<16x1xf32>
    %cst_3 = arith.constant 3.125000e-02 : f32
    %8 = vector.broadcast %cst_3 : f32 to vector<16x1xf32>
    %9 = arith.mulf %5, %8 : vector<16x1xf32>
    %10 = arith.mulf %7, %7 : vector<16x1xf32>
    %11 = arith.subf %9, %10 : vector<16x1xf32>
    %cst_4 = arith.constant 9.99999974E-6 : f32
    %12 = vector.broadcast %cst_4 : f32 to vector<16x1xf32>
    %13 = arith.addf %11, %12 : vector<16x1xf32>
    %14 = math.rsqrt %13 : vector<16x1xf32>
    %15 = vector.broadcast %7 : vector<16x1xf32> to vector<16x32xf32>
    %16 = arith.subf %0, %15 : vector<16x32xf32>
    %17 = vector.broadcast %14 : vector<16x1xf32> to vector<16x32xf32>
    %18 = arith.mulf %16, %17 : vector<16x32xf32>
    %c0_5 = arith.constant 0 : index
    %c0_6 = arith.constant 0 : index
    %19 = vector.load %arg2[%c0_5, %c0_6] : memref<1x32xf32, #tpu.memory_space<vmem>>, vector<1x32xf32>
    %20 = vector.broadcast %19 : vector<1x32xf32> to vector<16x32xf32>
    %21 = arith.mulf %18, %20 : vector<16x32xf32>
    %c0_7 = arith.constant 0 : index
    %c0_8 = arith.constant 0 : index
    %22 = vector.load %arg3[%c0_7, %c0_8] : memref<1x32xf32, #tpu.memory_space<vmem>>, vector<1x32xf32>
    %23 = vector.broadcast %22 : vector<1x32xf32> to vector<16x32xf32>
    %24 = arith.addf %21, %23 : vector<16x32xf32>
    %c0_9 = arith.constant 0 : index
    %c0_10 = arith.constant 0 : index
    %25 = vector.load %arg4[%c0_9, %c0_10] : memref<16x32xf32, #tpu.memory_space<vmem>>, vector<16x32xf32>
    tpu.vector_store %arg4[%c0_9, %c0_10], %24 {strides = array<i32>} : memref<16x32xf32, #tpu.memory_space<vmem>>, vector<16x32xf32>,
    return
  }
  func.func @transform_0(%arg0: i32) -> (i32, i32) {
    %c0_i32 = arith.constant 0 : i32
    %c0_i32_0 = arith.constant 0 : i32
    return %arg0, %c0_i32 : i32, i32
  }
  func.func @transform_1(%arg0: i32) -> (i32, i32) {
    %c0_i32 = arith.constant 0 : i32
    %c0_i32_0 = arith.constant 0 : i32
    %c0_i32_1 = arith.constant 0 : i32
    return %c0_i32, %c0_i32_0 : i32, i32
  }
  func.func @transform_2(%arg0: i32) -> (i32, i32) {
    %c0_i32 = arith.constant 0 : i32
    %c0_i32_0 = arith.constant 0 : i32
    %c0_i32_1 = arith.constant 0 : i32
    return %c0_i32, %c0_i32_0 : i32, i32
  }
  func.func @transform_3(%arg0: i32) -> (i32, i32) {
    %c0_i32 = arith.constant 0 : i32
    %c0_i32_0 = arith.constant 0 : i32
    return %arg0, %c0_i32 : i32, i32
  }
}

</mosaic_0001>

<llo_original>
// kernel: layer_norm.1
$region0: #{layer_norm.1}
  #allocation0 [shape = 'u32[]', space=smem, size = 0x4, offset = 0x4, fixed_abs, tag = 'smem constant byte address 0x4 - core index']
  #allocation1 [shape = 'u32[144,128]{1,0:T(1,128)}', space=vmem, size = 0x12000, scoped, tag = 'internal scratch']
  %s0 = inlined_call_operand.hbm [shape: f32[16,32], index: 0, kind: input, shape index: {}]
  %s1 = inlined_call_operand.vmem [shape: f32[1,32], index: 1, kind: input, shape index: {}]
  %s2 = inlined_call_operand.vmem [shape: f32[1,32], index: 2, kind: input, shape index: {}]
  %s3 = inlined_call_operand.hbm [shape: f32[16,32], index: 3, kind: output, shape index: {}]
  %s4 = sld [smem:[#allocation0]]
  $region26: #{layer_norm.1} parent=0
    _
  %s6 = ssub.s32 1, %s4
  %s7 = scalar_select 0, %s6, %s4
  $region1: #{layer_norm.1} parent=0
    #allocation2 [shape = 'u8[8192]{0}', space=vmem, size = 0x2000, scoped, tag = 'input window, operand 0, single buffered']
    #allocation3 [shape = 's32[1]{0}', space=sflag, size = 0x4, scoped, tag = 'scoped memory for layer_norm.1']
    #allocation4 [shape = 's32[1]{0}', space=sflag, size = 0x4, scoped, tag = 'scoped memory for layer_norm.1']
    #allocation5 [shape = 'u8[8192]{0}', space=vmem, size = 0x2000, scoped, tag = 'output window, operand 0, single buffered']
    %8 = vsyncpa [#allocation3], 0
    %9 = vsyncpa [#allocation4], 0
    // Predicated region
    $region2: #{layer_norm.1} parent=1 // pred_check
      _
    $region3: #{layer_norm.1} parent=1 // pred_check_branch
      %11 = sbr.rel (0) target = $region5
    $region4: #{layer_norm.1} parent=1 // pred_region
      %s13 = ssub.s32 256, 256
      %14 = vsyncadd [#allocation3], %s13
      %s15 = sshll.u32 [#allocation2], 4
      %s16 = int_to_ptr.vmem [resolvable:$true] %s15
      %21 = dma.hbm_to_vmem [thread:$0]  %s0, 256, %s16, [#allocation3], 128, 128, 8
    $region5: #{layer_norm.1} parent=1 // pred_fallthru
      _
    // Predicated region
    $region6: #{layer_norm.1} parent=1 // pred_check
      _
    $region7: #{layer_norm.1} parent=1 // pred_check_branch
      %23 = sbr.rel (0) target = $region9
    $region8: #{layer_norm.1} parent=1 // pred_region
      _
    $region9: #{layer_norm.1} parent=1 // pred_fallthru
      _
    // Predicated region
    $region10: #{layer_norm.1} parent=1 // pred_check
      _
    $region11: #{layer_norm.1} parent=1 // pred_check_branch
      %25 = sbr.rel (0) target = $region13
    $region12: #{layer_norm.1} parent=1 // pred_region
      _
    $region13: #{layer_norm.1} parent=1 // pred_fallthru
      _
    // Predicated region
    $region14: #{layer_norm.1} parent=1 // pred_check
      _
    $region15: #{layer_norm.1} parent=1 // pred_check_branch
      %27 = sbr.rel (0) target = $region17
    $region16: #{layer_norm.1} parent=1 // pred_region
      %28 = dma.done [#allocation3], 256
    $region17: #{layer_norm.1} parent=1 // pred_fallthru
      _
    %v29 = vld [vmem:[#allocation2] sm:$0xff]
    %v30 = vld [vmem:[#allocation2 + $0x8] sm:$0xff]
    %vm31 = vcmask 261120
    %v32 = vsel %vm31, %v29, 0.0
    %33 = vadd.xlane.f32.xlu0 %v32
    %v34 = vpop.xlane.xlu0 %33
    %v35 = vsel %vm31, %v30, 0.0
    %36 = vadd.xlane.f32.xlu0 %v35
    %v37 = vpop.xlane.xlu0 %36
    %v38 = vmul.f32 %v29, %v29
    %v39 = vmul.f32 %v30, %v30
    %v40 = vsel %vm31, %v38, 0.0
    %41 = vadd.xlane.f32.xlu0 %v40
    %v42 = vpop.xlane.xlu0 %41
    %v43 = vsel %vm31, %v39, 0.0
    %44 = vadd.xlane.f32.xlu0 %v43
    %v45 = vpop.xlane.xlu0 %44
    %v46 = vmul.f32 %v34, 0.03125
    %v47 = vmul.f32 %v37, 0.03125
    %v48 = vmul.f32 %v42, 0.03125
    %v49 = vmul.f32 %v45, 0.03125
    %v50 = vmul.f32 %v46, %v46
    %v51 = vmul.f32 %v47, %v47
    %v52 = vsub.f32 %v48, %v50
    %v53 = vsub.f32 %v49, %v51
    %v54 = vadd.f32 %v52, 1e-05
    %v55 = vadd.f32 %v53, 1e-05
    %v56 = vrsqrt.pop %v54
    %v57 = vrsqrt.pop %v55
    %v58 = vsub.f32 %v29, %v46
    %v59 = vsub.f32 %v30, %v47
    %v60 = vmul.f32 %v58, %v56
    %v61 = vmul.f32 %v59, %v57
    %v62 = vld [vmem:[%s1] sm:$0x1]
    %v64 = vlaneseq
    %v65 = vshrl.u32 %v64, 7
    %v66 = vsub.s32 0, %v65
    %v67 = vrot.slane %v62, %v66
    %v69 = vmul.f32 %v60, %v67
    %v70 = vmul.f32 %v61, %v67
    %v71 = vld [vmem:[%s2] sm:$0x1]
    %v73 = vlaneseq
    %v74 = vshrl.u32 %v73, 7
    %v75 = vsub.s32 0, %v74
    %v76 = vrot.slane %v71, %v75
    %v78 = vadd.f32 %v69, %v76
    %v79 = vadd.f32 %v70, %v76
    %80 = vst.msk [vmem:[#allocation5] sm:$0xff] %vm31, %v78
    %81 = vst.msk [vmem:[#allocation5 + $0x8] sm:$0xff] %vm31, %v79
    // Predicated region
    $region18: #{layer_norm.1} parent=1 // pred_check
      _
    $region19: #{layer_norm.1} parent=1 // pred_check_branch
      %83 = sbr.rel (0) target = $region21
    $region20: #{layer_norm.1} parent=1 // pred_region
      %s85 = ssub.s32 256, 256
      %86 = vsyncadd [#allocation4], %s85
      %s87 = sshll.u32 [#allocation5], 4
      %s88 = int_to_ptr.vmem [resolvable:$true] %s87
      %93 = dma.vmem_to_hbm [thread:$0]  %s88, 256, %s3, [#allocation4], 128, 128, 8
    $region21: #{layer_norm.1} parent=1 // pred_fallthru
      _
    // Predicated region
    $region22: #{layer_norm.1} parent=1 // pred_check
      _
    $region23: #{layer_norm.1} parent=1 // pred_check_branch
      %95 = sbr.rel (0) target = $region25
    $region24: #{layer_norm.1} parent=1 // pred_region
      %96 = dma.done [#allocation4], 256
    $region25: #{layer_norm.1} parent=1 // pred_fallthru
      _
    %97 = vsyncpa [#allocation3], 1
    %98 = vsyncpa [#allocation4], 1

</llo_original>
